<compile_context>
chip_gen: v7x
topology: tpu7x:2x2x1
jax: 0.10.0
libtpu: 0.0.40
codegen_flags: <defaults>
</compile_context>

<pallas_src>
import jax
import jax.numpy as jnp
from jax.experimental import pallas as pl
from jax.experimental.pallas import tpu as pltpu

LRELU_SLOPE = 0.2
H1, H2 = 512, 256
OUT_PAD = 128  # final layer padded to 128 lanes -> lane-dense MXU output & store


def _round_up(x, m):
    return ((x + m - 1) // m) * m


def discriminator_kernel(z_ref, w1_ref, b1_ref, w2_ref, b2_ref, w3_ref, b3_ref,
                         out_ref):
    """Fused 3-layer MLP for one (TM, latent_dim) batch tile.

    Matmuls run on the MXU with bf16 inputs / f32 accumulation; LeakyReLU and
    the final sigmoid run on the VPU/EUP in f32. Weights are whole-array VMEM
    blocks reused across all grid steps.
    """
    # Layer 1: Linear(latent_dim, 512) + LeakyReLU(0.2)
    z = z_ref[...].astype(jnp.bfloat16)
    h1 = jnp.dot(z, w1_ref[...], preferred_element_type=jnp.float32) + b1_ref[...]
    h1 = jnp.where(h1 > 0, h1, LRELU_SLOPE * h1)

    # Layer 2: Linear(512, 256) + LeakyReLU(0.2)
    h2 = jnp.dot(h1.astype(jnp.bfloat16), w2_ref[...],
                 preferred_element_type=jnp.float32) + b2_ref[...]
    h2 = jnp.where(h2 > 0, h2, LRELU_SLOPE * h2)

    # Layer 3: Linear(256, 1) + Sigmoid, padded to 128 lanes (column 0 is real)
    h3 = jnp.dot(h2.astype(jnp.bfloat16), w3_ref[...],
                 preferred_element_type=jnp.float32) + b3_ref[...]
    out_ref[...] = jax.nn.sigmoid(h3).astype(out_ref.dtype)


def discriminator_forward(z, params, *, block_m=256):
    """Batch-tiled fused forward. Returns (batch, 1) f32 probabilities."""
    w1, b1, w2, b2, w3p, b3p = params
    batch, latent_dim = z.shape

    # Rows per grid step: multiple of 8 (sublane), capped at block_m.
    tm = min(block_m, max(8, _round_up(batch, 8)))
    b_pad = _round_up(batch, tm)
    if b_pad != batch:
        z = jnp.pad(z, ((0, b_pad - batch), (0, 0)))
    grid = (b_pad // tm,)

    const = lambda i: (0, 0)  # weights: same block every step -> stay resident
    in_specs = [
        pl.BlockSpec((tm, latent_dim), lambda i: (i, 0)),  # z rows
        pl.BlockSpec((latent_dim, H1), const),             # w1 (bf16)
        pl.BlockSpec((1, H1), const),                      # b1 (f32)
        pl.BlockSpec((H1, H2), const),                     # w2 (bf16)
        pl.BlockSpec((1, H2), const),                      # b2 (f32)
        pl.BlockSpec((H2, OUT_PAD), const),                # w3 padded (bf16)
        pl.BlockSpec((1, OUT_PAD), const),                 # b3 padded (f32)
    ]
    out_spec = pl.BlockSpec((tm, OUT_PAD), lambda i: (i, 0))

    flops = 2 * b_pad * (latent_dim * H1 + H1 * H2 + H2 * OUT_PAD)
    bytes_accessed = (
        z.size * z.dtype.itemsize
        + sum(int(p.size) * p.dtype.itemsize for p in params)
        + b_pad * OUT_PAD * 4
    )
    cost = pl.CostEstimate(flops=flops,
                           transcendentals=b_pad * OUT_PAD,  # sigmoid exp
                           bytes_accessed=bytes_accessed)

    out = pl.pallas_call(
        discriminator_kernel,
        out_shape=jax.ShapeDtypeStruct((b_pad, OUT_PAD), jnp.float32),
        grid=grid,
        in_specs=in_specs,
        out_specs=out_spec,
        compiler_params=pltpu.CompilerParams(
            dimension_semantics=("parallel",)),
        cost_estimate=cost,
    )(z, w1, b1, w2, b2, w3p, b3p)

    # Drop padded rows and padded output lanes.
    return out[:batch, :1]


def init_params(key, latent_dim):
    """Deterministic init (PyTorch-Linear-style uniform bounds).

    Weights stored bf16 (native MXU dtype, halves weight HBM traffic);
    biases stay f32. Final layer padded to OUT_PAD columns (col 0 is real).
    """
    ks = jax.random.split(key, 6)

    def linear(kw, kb, fan_in, fan_out):
        bound = 1.0 / jnp.sqrt(fan_in)
        w = jax.random.uniform(kw, (fan_in, fan_out), jnp.float32, -bound, bound)
        b = jax.random.uniform(kb, (1, fan_out), jnp.float32, -bound, bound)
        return w, b

    w1, b1 = linear(ks[0], ks[1], latent_dim, H1)
    w2, b2 = linear(ks[2], ks[3], H1, H2)
    w3, b3 = linear(ks[4], ks[5], H2, 1)

    w3p = jnp.zeros((H2, OUT_PAD), jnp.float32).at[:, :1].set(w3)
    b3p = jnp.zeros((1, OUT_PAD), jnp.float32).at[:, :1].set(b3)

    return (w1.astype(jnp.bfloat16), b1,
            w2.astype(jnp.bfloat16), b2,
            w3p.astype(jnp.bfloat16), b3p)


def reference_forward(z, params):
    """Pure-JAX reference mirroring the kernel's bf16-weight / f32-accum math."""
    w1, b1, w2, b2, w3p, b3p = params
    h = jnp.dot(z.astype(jnp.bfloat16), w1,
                preferred_element_type=jnp.float32) + b1
    h = jnp.where(h > 0, h, LRELU_SLOPE * h)
    h = jnp.dot(h.astype(jnp.bfloat16), w2,
                preferred_element_type=jnp.float32) + b2
    h = jnp.where(h > 0, h, LRELU_SLOPE * h)
    h = jnp.dot(h.astype(jnp.bfloat16), w3p,
                preferred_element_type=jnp.float32) + b3p
    return jax.nn.sigmoid(h)[:, :1]


if __name__ == "__main__":
    latent_dim = 32   # opt.latent_dim
    batch = 8

    key = jax.random.PRNGKey(0)
    k_params, k_z = jax.random.split(key)
    params = init_params(k_params, latent_dim)
    z = jax.random.normal(k_z, (batch, latent_dim), dtype=jnp.float32)

    out = discriminator_forward(z, params)
    out = jax.block_until_ready(out)

    ref = reference_forward(z, params)
    assert out.shape == (batch, 1)
    assert bool(jnp.all(jnp.isfinite(out)))
    assert jnp.allclose(out, ref, atol=1e-4, rtol=1e-4)

    # Also exercise a non-divisible, larger batch (tiled grid + tail padding).
    z_big = jax.random.normal(jax.random.PRNGKey(1), (300, latent_dim), jnp.float32)
    out_big = jax.block_until_ready(discriminator_forward(z_big, params))
    ref_big = reference_forward(z_big, params)
    assert out_big.shape == (300, 1)
    assert jnp.allclose(out_big, ref_big, atol=1e-4, rtol=1e-4)

    print("KERNEL_OK")
</pallas_src>

<mosaic_0001>
module attributes {stable_mosaic.version = 11 : i64} {
  func.func @discriminator_kernel(%arg0: i32, %arg1: memref<8x32xf32, #tpu.memory_space<vmem>>, %arg2: memref<32x512xbf16, #tpu.memory_space<vmem>>, %arg3: memref<1x512xf32, #tpu.memory_space<vmem>>, %arg4: memref<512x256xbf16, #tpu.memory_space<vmem>>, %arg5: memref<1x256xf32, #tpu.memory_space<vmem>>, %arg6: memref<256x128xbf16, #tpu.memory_space<vmem>>, %arg7: memref<1x128xf32, #tpu.memory_space<vmem>>, %arg8: memref<8x128xf32, #tpu.memory_space<vmem>>) attributes {dimension_semantics = [#tpu.dimension_semantics<parallel>], iteration_bounds = array<i64: 1>, scalar_prefetch = 0 : i64, scratch_operands = 0 : i64, tpu.core_type = #tpu.core_type<tc>, window_params = [{transform_indices = @transform_0, window_bounds = array<i64: 8, 32>}, {pipeline_mode = #tpu.pipeline_mode<synchronous>, transform_indices = @transform_1, window_bounds = array<i64: 32, 512>}, {pipeline_mode = #tpu.pipeline_mode<synchronous>, transform_indices = @transform_2, window_bounds = array<i64: 1, 512>}, {pipeline_mode = #tpu.pipeline_mode<synchronous>, transform_indices = @transform_3, window_bounds = array<i64: 512, 256>}, {pipeline_mode = #tpu.pipeline_mode<synchronous>, transform_indices = @transform_4, window_bounds = array<i64: 1, 256>}, {pipeline_mode = #tpu.pipeline_mode<synchronous>, transform_indices = @transform_5, window_bounds = array<i64: 256, 128>}, {pipeline_mode = #tpu.pipeline_mode<synchronous>, transform_indices = @transform_6, window_bounds = array<i64: 1, 128>}, {transform_indices = @transform_7, window_bounds = array<i64: 8, 128>}]} {
    %c0 = arith.constant 0 : index
    %c0_0 = arith.constant 0 : index
    %0 = vector.load %arg1[%c0, %c0_0] : memref<8x32xf32, #tpu.memory_space<vmem>>, vector<8x32xf32>
    %1 = arith.truncf %0 : vector<8x32xf32> to vector<8x32xbf16>
    %c0_1 = arith.constant 0 : index
    %c0_2 = arith.constant 0 : index
    %2 = vector.load %arg2[%c0_1, %c0_2] : memref<32x512xbf16, #tpu.memory_space<vmem>>, vector<32x512xbf16>
    %cst = arith.constant dense<0.000000e+00> : vector<8x512xf32>
    %3 = tpu.matmul %1, %2, %cst {dimension_numbers = #tpu.dot_dimension_numbers<[1], [0], [0], [1], [0, 0, 1, 1], [], []>} : vector<8x32xbf16>, vector<32x512xbf16>, vector<8x512xf32> -> vector<8x512xf32>
    %c0_3 = arith.constant 0 : index
    %c0_4 = arith.constant 0 : index
    %4 = vector.load %arg3[%c0_3, %c0_4] : memref<1x512xf32, #tpu.memory_space<vmem>>, vector<1x512xf32>
    %5 = vector.broadcast %4 : vector<1x512xf32> to vector<8x512xf32>
    %6 = arith.addf %3, %5 : vector<8x512xf32>
    %cst_5 = arith.constant 0.000000e+00 : f32
    %7 = vector.broadcast %cst_5 : f32 to vector<8x512xf32>
    %8 = arith.cmpf ogt, %6, %7 : vector<8x512xf32>
    %cst_6 = arith.constant 2.000000e-01 : f32
    %9 = vector.broadcast %cst_6 : f32 to vector<8x512xf32>
    %10 = arith.mulf %9, %6 : vector<8x512xf32>
    %11 = arith.select %8, %6, %10 : vector<8x512xi1>, vector<8x512xf32>
    %12 = arith.truncf %11 : vector<8x512xf32> to vector<8x512xbf16>
    %c0_7 = arith.constant 0 : index
    %c0_8 = arith.constant 0 : index
    %13 = vector.load %arg4[%c0_7, %c0_8] : memref<512x256xbf16, #tpu.memory_space<vmem>>, vector<512x256xbf16>
    %cst_9 = arith.constant dense<0.000000e+00> : vector<8x256xf32>
    %14 = tpu.matmul %12, %13, %cst_9 {dimension_numbers = #tpu.dot_dimension_numbers<[1], [0], [0], [1], [0, 0, 1, 1], [], []>} : vector<8x512xbf16>, vector<512x256xbf16>, vector<8x256xf32> -> vector<8x256xf32>
    %c0_10 = arith.constant 0 : index
    %c0_11 = arith.constant 0 : index
    %15 = vector.load %arg5[%c0_10, %c0_11] : memref<1x256xf32, #tpu.memory_space<vmem>>, vector<1x256xf32>
    %16 = vector.broadcast %15 : vector<1x256xf32> to vector<8x256xf32>
    %17 = arith.addf %14, %16 : vector<8x256xf32>
    %cst_12 = arith.constant 0.000000e+00 : f32
    %18 = vector.broadcast %cst_12 : f32 to vector<8x256xf32>
    %19 = arith.cmpf ogt, %17, %18 : vector<8x256xf32>
    %cst_13 = arith.constant 2.000000e-01 : f32
    %20 = vector.broadcast %cst_13 : f32 to vector<8x256xf32>
    %21 = arith.mulf %20, %17 : vector<8x256xf32>
    %22 = arith.select %19, %17, %21 : vector<8x256xi1>, vector<8x256xf32>
    %23 = arith.truncf %22 : vector<8x256xf32> to vector<8x256xbf16>
    %c0_14 = arith.constant 0 : index
    %c0_15 = arith.constant 0 : index
    %24 = vector.load %arg6[%c0_14, %c0_15] : memref<256x128xbf16, #tpu.memory_space<vmem>>, vector<256x128xbf16>
    %cst_16 = arith.constant dense<0.000000e+00> : vector<8x128xf32>
    %25 = tpu.matmul %23, %24, %cst_16 {dimension_numbers = #tpu.dot_dimension_numbers<[1], [0], [0], [1], [0, 0, 1, 1], [], []>} : vector<8x256xbf16>, vector<256x128xbf16>, vector<8x128xf32> -> vector<8x128xf32>
    %c0_17 = arith.constant 0 : index
    %c0_18 = arith.constant 0 : index
    %26 = vector.load %arg7[%c0_17, %c0_18] : memref<1x128xf32, #tpu.memory_space<vmem>>, vector<1x128xf32>
    %27 = vector.broadcast %26 : vector<1x128xf32> to vector<8x128xf32>
    %28 = arith.addf %25, %27 : vector<8x128xf32>
    %29 = arith.negf %28 : vector<8x128xf32>
    %30 = math.exp %29 : vector<8x128xf32>
    %cst_19 = arith.constant 1.000000e+00 : f32
    %31 = vector.broadcast %cst_19 : f32 to vector<8x128xf32>
    %32 = arith.addf %31, %30 : vector<8x128xf32>
    %33 = arith.divf %31, %32 : vector<8x128xf32>
    %c0_20 = arith.constant 0 : index
    %c0_21 = arith.constant 0 : index
    %34 = vector.load %arg8[%c0_20, %c0_21] : memref<8x128xf32, #tpu.memory_space<vmem>>, vector<8x128xf32>
    tpu.vector_store %arg8[%c0_20, %c0_21], %33 {strides = array<i32>} : memref<8x128xf32, #tpu.memory_space<vmem>>, vector<8x128xf32>,
    return
  }
  func.func @transform_0(%arg0: i32) -> (i32, i32) {
    %c0_i32 = arith.constant 0 : i32
    %c0_i32_0 = arith.constant 0 : i32
    return %arg0, %c0_i32 : i32, i32
  }
  func.func @transform_1(%arg0: i32) -> (i32, i32) {
    %c0_i32 = arith.constant 0 : i32
    %c0_i32_0 = arith.constant 0 : i32
    %c0_i32_1 = arith.constant 0 : i32
    return %c0_i32, %c0_i32_0 : i32, i32
  }
  func.func @transform_2(%arg0: i32) -> (i32, i32) {
    %c0_i32 = arith.constant 0 : i32
    %c0_i32_0 = arith.constant 0 : i32
    %c0_i32_1 = arith.constant 0 : i32
    return %c0_i32, %c0_i32_0 : i32, i32
  }
  func.func @transform_3(%arg0: i32) -> (i32, i32) {
    %c0_i32 = arith.constant 0 : i32
    %c0_i32_0 = arith.constant 0 : i32
    %c0_i32_1 = arith.constant 0 : i32
    return %c0_i32, %c0_i32_0 : i32, i32
  }
  func.func @transform_4(%arg0: i32) -> (i32, i32) {
    %c0_i32 = arith.constant 0 : i32
    %c0_i32_0 = arith.constant 0 : i32
    %c0_i32_1 = arith.constant 0 : i32
    return %c0_i32, %c0_i32_0 : i32, i32
  }
  func.func @transform_5(%arg0: i32) -> (i32, i32) {
    %c0_i32 = arith.constant 0 : i32
    %c0_i32_0 = arith.constant 0 : i32
    %c0_i32_1 = arith.constant 0 : i32
    return %c0_i32, %c0_i32_0 : i32, i32
  }
  func.func @transform_6(%arg0: i32) -> (i32, i32) {
    %c0_i32 = arith.constant 0 : i32
    %c0_i32_0 = arith.constant 0 : i32
    %c0_i32_1 = arith.constant 0 : i32
    return %c0_i32, %c0_i32_0 : i32, i32
  }
  func.func @transform_7(%arg0: i32) -> (i32, i32) {
    %c0_i32 = arith.constant 0 : i32
    %c0_i32_0 = arith.constant 0 : i32
    return %arg0, %c0_i32 : i32, i32
  }
}

</mosaic_0001>

<llo_original>
// kernel: tpu_custom_call.1
$region0: #{tpu_custom_call.1}
  #allocation0 [shape = 'u32[]', space=smem, size = 0x4, offset = 0x4, fixed_abs, tag = 'smem constant byte address 0x4 - core index']
  #allocation1 [shape = 'u32[144,128]{1,0:T(1,128)}', space=vmem, size = 0x12000, scoped, tag = 'internal scratch']
  %s0 = inlined_call_operand.hbm [shape: f32[8,32], index: 0, kind: input, shape index: {}]
  %s1 = inlined_call_operand.hbm [shape: bf16[32,512], index: 1, kind: input, shape index: {}]
  %s2 = inlined_call_operand.vmem [shape: f32[1,512], index: 2, kind: input, shape index: {}]
  %s3 = inlined_call_operand.hbm [shape: bf16[512,256], index: 3, kind: input, shape index: {}]
  %s4 = inlined_call_operand.vmem [shape: f32[1,256], index: 4, kind: input, shape index: {}]
  %s5 = inlined_call_operand.hbm [shape: bf16[256,128], index: 5, kind: input, shape index: {}]
  %s6 = inlined_call_operand.vmem [shape: f32[1,128], index: 6, kind: input, shape index: {}]
  %s7 = inlined_call_operand.hbm [shape: f32[8,128], index: 7, kind: output, shape index: {}]
  %s8 = sld [smem:[#allocation0]]
  $region54: #{tpu_custom_call.1} parent=0
    _
  %s10 = ssub.s32 1, %s8
  %s11 = scalar_select 0, %s10, %s8
  $region1: #{tpu_custom_call.1} parent=0
    #allocation2 [shape = 'u8[4096]{0}', space=vmem, size = 0x1000, scoped, tag = 'input window, operand 0, single buffered']
    #allocation3 [shape = 's32[1]{0}', space=sflag, size = 0x4, scoped, tag = 'scoped memory for tpu_custom_call.1']
    #allocation4 [shape = 's32[1]{0}', space=sflag, size = 0x4, scoped, tag = 'scoped memory for tpu_custom_call.1']
    #allocation5 [shape = 'u8[32768]{0}', space=vmem, size = 0x8000, scoped, tag = 'input window, operand 1, single buffered']
    #allocation6 [shape = 's32[1]{0}', space=sflag, size = 0x4, scoped, tag = 'scoped memory for tpu_custom_call.1']
    #allocation7 [shape = 'u8[262144]{0}', space=vmem, size = 0x40000, scoped, tag = 'input window, operand 3, single buffered']
    #allocation8 [shape = 'u8[65536]{0}', space=vmem, size = 0x10000, scoped, tag = 'input window, operand 5, single buffered']
    #allocation9 [shape = 's32[1]{0}', space=sflag, size = 0x4, scoped, tag = 'scoped memory for tpu_custom_call.1']
    #allocation10 [shape = 'u8[4096]{0}', space=vmem, size = 0x1000, scoped, tag = 'output window, operand 0, single buffered']
    %12 = vsyncpa [#allocation3], 0
    %13 = vsyncpa [#allocation6], 0
    %14 = vsyncpa [#allocation9], 0
    %15 = vsyncpa [#allocation4], 0
    // Predicated region
    $region2: #{tpu_custom_call.1} parent=1 // pred_check
      _
    $region3: #{tpu_custom_call.1} parent=1 // pred_check_branch
      %17 = sbr.rel (0) target = $region5
    $region4: #{tpu_custom_call.1} parent=1 // pred_region
      %s19 = ssub.s32 128, 128
      %20 = vsyncadd [#allocation3], %s19
      %s22 = sshll.u32 [#allocation2], 4
      %s23 = int_to_ptr.vmem [resolvable:$true] %s22
      %25 = dma.hbm_to_vmem [thread:$0]  %s0, 128, %s23, [#allocation3]
    $region5: #{tpu_custom_call.1} parent=1 // pred_fallthru
      _
    // Predicated region
    $region6: #{tpu_custom_call.1} parent=1 // pred_check
      _
    $region7: #{tpu_custom_call.1} parent=1 // pred_check_branch
      %27 = sbr.rel (0) target = $region9
    $region8: #{tpu_custom_call.1} parent=1 // pred_region
      %s29 = ssub.s32 1024, 1024
      %30 = vsyncadd [#allocation6], %s29
      %s31 = sshll.u32 [#allocation5], 4
      %s32 = int_to_ptr.vmem [resolvable:$true] %s31
      %37 = dma.hbm_to_vmem [thread:$0]  %s1, 1024, %s32, [#allocation6], 256, 256, 16
    $region9: #{tpu_custom_call.1} parent=1 // pred_fallthru
      _
    // Predicated region
    $region10: #{tpu_custom_call.1} parent=1 // pred_check
      _
    $region11: #{tpu_custom_call.1} parent=1 // pred_check_branch
      %39 = sbr.rel (0) target = $region13
    $region12: #{tpu_custom_call.1} parent=1 // pred_region
      _
    $region13: #{tpu_custom_call.1} parent=1 // pred_fallthru
      _
    // Predicated region
    $region14: #{tpu_custom_call.1} parent=1 // pred_check
      _
    $region15: #{tpu_custom_call.1} parent=1 // pred_check_branch
      %41 = sbr.rel (0) target = $region17
    $region16: #{tpu_custom_call.1} parent=1 // pred_region
      %s43 = ssub.s32 8192, 8192
      %44 = vsyncadd [#allocation6], %s43
      %s45 = sshll.u32 [#allocation7], 4
      %s46 = int_to_ptr.vmem [resolvable:$true] %s45
      %51 = dma.hbm_to_vmem [thread:$0]  %s3, 8192, %s46, [#allocation6], 128, 128, 8
    $region17: #{tpu_custom_call.1} parent=1 // pred_fallthru
      _
    // Predicated region
    $region18: #{tpu_custom_call.1} parent=1 // pred_check
      _
    $region19: #{tpu_custom_call.1} parent=1 // pred_check_branch
      %53 = sbr.rel (0) target = $region21
    $region20: #{tpu_custom_call.1} parent=1 // pred_region
      _
    $region21: #{tpu_custom_call.1} parent=1 // pred_fallthru
      _
    // Predicated region
    $region22: #{tpu_custom_call.1} parent=1 // pred_check
      _
    $region23: #{tpu_custom_call.1} parent=1 // pred_check_branch
      %55 = sbr.rel (0) target = $region25
    $region24: #{tpu_custom_call.1} parent=1 // pred_region
      %s57 = ssub.s32 2048, 2048
      %58 = vsyncadd [#allocation9], %s57
      %s59 = sshll.u32 [#allocation8], 4
      %s60 = int_to_ptr.vmem [resolvable:$true] %s59
      %65 = dma.hbm_to_vmem [thread:$0]  %s5, 2048, %s60, [#allocation9], 64, 64, 4
    $region25: #{tpu_custom_call.1} parent=1 // pred_fallthru
      _
    // Predicated region
    $region26: #{tpu_custom_call.1} parent=1 // pred_check
      _
    $region27: #{tpu_custom_call.1} parent=1 // pred_check_branch
      %67 = sbr.rel (0) target = $region29
    $region28: #{tpu_custom_call.1} parent=1 // pred_region
      _
    $region29: #{tpu_custom_call.1} parent=1 // pred_fallthru
      _
    // Predicated region
    $region30: #{tpu_custom_call.1} parent=1 // pred_check
      _
    $region31: #{tpu_custom_call.1} parent=1 // pred_check_branch
      %69 = sbr.rel (0) target = $region33
    $region32: #{tpu_custom_call.1} parent=1 // pred_region
      %70 = dma.done [#allocation3], 128
    $region33: #{tpu_custom_call.1} parent=1 // pred_fallthru
      _
    // Predicated region
    $region34: #{tpu_custom_call.1} parent=1 // pred_check
      _
    $region35: #{tpu_custom_call.1} parent=1 // pred_check_branch
      %72 = sbr.rel (0) target = $region37
    $region36: #{tpu_custom_call.1} parent=1 // pred_region
      %73 = dma.done [#allocation6], 1024
    $region37: #{tpu_custom_call.1} parent=1 // pred_fallthru
      _
    // Predicated region
    $region38: #{tpu_custom_call.1} parent=1 // pred_check
      _
    $region39: #{tpu_custom_call.1} parent=1 // pred_check_branch
      %75 = sbr.rel (0) target = $region41
    $region40: #{tpu_custom_call.1} parent=1 // pred_region
      %76 = dma.done [#allocation6], 8192
    $region41: #{tpu_custom_call.1} parent=1 // pred_fallthru
      _
    // Predicated region
    $region42: #{tpu_custom_call.1} parent=1 // pred_check
      _
    $region43: #{tpu_custom_call.1} parent=1 // pred_check_branch
      %78 = sbr.rel (0) target = $region45
    $region44: #{tpu_custom_call.1} parent=1 // pred_region
      %79 = dma.done [#allocation9], 2048
    $region45: #{tpu_custom_call.1} parent=1 // pred_fallthru
      _
    %v81 = vld [vmem:[#allocation2] sm:$0xff]
    %v82 = vpack.c.bf16 %v81, %v81
    %v83 = vld [vmem:[#allocation5] sm:$0xff]
    %v84 = vld [vmem:[#allocation5 + $0x8] sm:$0xff]
    %v85 = vld [vmem:[#allocation5 + $0x10] sm:$0xff]
    %v86 = vld [vmem:[#allocation5 + $0x18] sm:$0xff]
    %v87 = vld [vmem:[#allocation5 + $0x20] sm:$0xff]
    %v88 = vld [vmem:[#allocation5 + $0x28] sm:$0xff]
    %v89 = vld [vmem:[#allocation5 + $0x30] sm:$0xff]
    %v90 = vld [vmem:[#allocation5 + $0x38] sm:$0xff]
    %v91 = vld [vmem:[%s2] sm:$0xf]
    %v93 = vlaneseq
    %v94 = vshrl.u32 %v93, 7
    %v95 = vsub.s32 0, %v94
    %v96 = vrot.slane %v91, %v95
    %v97 = vlaneseq
    %v98 = vshrl.u32 %v97, 7
    %v99 = vsub.s32 1, %v98
    %v100 = vrot.slane %v91, %v99
    %v101 = vlaneseq
    %v102 = vshrl.u32 %v101, 7
    %v103 = vsub.s32 2, %v102
    %v104 = vrot.slane %v91, %v103
    %v105 = vlaneseq
    %v106 = vshrl.u32 %v105, 7
    %v107 = vsub.s32 3, %v106
    %v108 = vrot.slane %v91, %v107
    %v121 = vunpack.c.l.b16 %v83
    %v122 = vunpack.c.h.b16 %v83
    %v123 = vunpack.c.l.b16 %v84
    %v124 = vunpack.c.h.b16 %v84
    %v125 = vunpack.c.l.b16 %v85
    %v126 = vunpack.c.h.b16 %v85
    %v127 = vunpack.c.l.b16 %v86
    %v128 = vunpack.c.h.b16 %v86
    %v129 = vunpack.c.l.b16 %v87
    %v130 = vunpack.c.h.b16 %v87
    %v131 = vunpack.c.l.b16 %v88
    %v132 = vunpack.c.h.b16 %v88
    %v133 = vunpack.c.l.b16 %v89
    %v134 = vunpack.c.h.b16 %v89
    %v135 = vunpack.c.l.b16 %v90
    %v136 = vunpack.c.h.b16 %v90
    %v137 = vpack.c.b16 %v125, %v121
    %v138 = vpack.c.b16 %v126, %v122
    %v139 = vpack.c.b16 %v127, %v123
    %v140 = vpack.c.b16 %v128, %v124
    %v141 = vpack.c.b16 %v133, %v129
    %v142 = vpack.c.b16 %v134, %v130
    %v143 = vpack.c.b16 %v135, %v131
    %v144 = vpack.c.b16 %v136, %v132
    %vm153 = vcmask 261120
    %v155 = vsel %vm153, %v82, 0
    %157 = vmatprep.subr.bf16.mxu0 %v138
    %158 = vmatpush1.bf16.msra.mxu0 %v137
    %159 = vmatprep.subr.bf16.mxu0 %v142
    %160 = vmatpush1.bf16.msra.mxu0 %v141
    %161 = vmatprep.subr.bf16.mxu0 0
    %162 = vmatpush1.bf16.msra.mxu0 0
    %163 = vmatprep.subr.bf16.mxu0 0
    %164 = vmatpush1.bf16.msra.mxu0 0
    %165 = vmatprep.subr.bf16.mxu0 0
    %166 = vmatpush1.bf16.msra.mxu0 0
    %167 = vmatprep.subr.bf16.mxu0 0
    %168 = vmatpush1.bf16.msra.mxu0 0
    %169 = vmatprep.subr.bf16.mxu0 0
    %170 = vmatpush1.bf16.msra.mxu0 0
    %171 = vmatprep.subr.bf16.mxu0 0
    %172 = vmatpush1.bf16.msra.mxu0 0
    %173 = vmatprep.subr.bf16.mxu0 0
    %174 = vmatpush1.bf16.msra.mxu0 0
    %175 = vmatprep.subr.bf16.mxu0 0
    %176 = vmatpush1.bf16.msra.mxu0 0
    %177 = vmatprep.subr.bf16.mxu0 0
    %178 = vmatpush1.bf16.msra.mxu0 0
    %179 = vmatprep.subr.bf16.mxu0 0
    %180 = vmatpush1.bf16.msra.mxu0 0
    %181 = vmatprep.subr.bf16.mxu0 0
    %182 = vmatpush1.bf16.msra.mxu0 0
    %183 = vmatprep.subr.bf16.mxu0 0
    %184 = vmatpush1.bf16.msra.mxu0 0
    %185 = vmatprep.subr.bf16.mxu0 0
    %186 = vmatpush1.bf16.msra.mxu0 0
    %187 = vmatprep.subr.bf16.mxu0 0
    %188 = vmatpush1.bf16.msra.mxu0 0
    %189 = vmatprep.mubr.bf16.mxu0 0
    %190 = vmatmul.mubr.bf16.gmra.mrb[0].mxu0 %v155
    %v191 = vpop.f32.mrb[0].mxu0
    %v192 = vadd.f32 %v96, %v191
    %v193 = vpop.f32.mrb[0].mxu0
    %v194 = vadd.f32 %v100, %v193
    %v195 = vpop.f32.mrb[0].mxu0
    %v196 = vpop.f32.mrb[0].mxu0
    %197 = vdwg.mxu0
    %198 = vmatprep.subr.bf16.mxu0 %v140
    %199 = vmatpush1.bf16.msra.mxu0 %v139
    %200 = vmatprep.subr.bf16.mxu0 %v144
    %201 = vmatpush1.bf16.msra.mxu0 %v143
    %202 = vmatprep.subr.bf16.mxu0 0
    %203 = vmatpush1.bf16.msra.mxu0 0
    %204 = vmatprep.subr.bf16.mxu0 0
    %205 = vmatpush1.bf16.msra.mxu0 0
    %206 = vmatprep.subr.bf16.mxu0 0
    %207 = vmatpush1.bf16.msra.mxu0 0
    %208 = vmatprep.subr.bf16.mxu0 0
    %209 = vmatpush1.bf16.msra.mxu0 0
    %210 = vmatprep.subr.bf16.mxu0 0
    %211 = vmatpush1.bf16.msra.mxu0 0
    %212 = vmatprep.subr.bf16.mxu0 0
    %213 = vmatpush1.bf16.msra.mxu0 0
    %214 = vmatprep.subr.bf16.mxu0 0
    %215 = vmatpush1.bf16.msra.mxu0 0
    %216 = vmatprep.subr.bf16.mxu0 0
    %217 = vmatpush1.bf16.msra.mxu0 0
    %218 = vmatprep.subr.bf16.mxu0 0
    %219 = vmatpush1.bf16.msra.mxu0 0
    %220 = vmatprep.subr.bf16.mxu0 0
    %221 = vmatpush1.bf16.msra.mxu0 0
    %222 = vmatprep.subr.bf16.mxu0 0
    %223 = vmatpush1.bf16.msra.mxu0 0
    %224 = vmatprep.subr.bf16.mxu0 0
    %225 = vmatpush1.bf16.msra.mxu0 0
    %226 = vmatprep.subr.bf16.mxu0 0
    %227 = vmatpush1.bf16.msra.mxu0 0
    %228 = vmatprep.subr.bf16.mxu0 0
    %229 = vmatpush1.bf16.msra.mxu0 0
    %230 = vmatprep.mubr.bf16.mxu0 0
    %231 = vmatmul.mubr.bf16.gmra.mrb[0].mxu0 %v155
    %v232 = vpop.f32.mrb[0].mxu0
    %v233 = vadd.f32 %v104, %v232
    %v234 = vpop.f32.mrb[0].mxu0
    %v235 = vadd.f32 %v108, %v234
    %v236 = vpop.f32.mrb[0].mxu0
    %v237 = vpop.f32.mrb[0].mxu0
    %238 = vdwg.mxu0
    %vm239 = vcmp.gt.f32.partialorder %v192, 0.0
    %vm240 = vcmp.gt.f32.partialorder %v194, 0.0
    %vm241 = vcmp.gt.f32.partialorder %v233, 0.0
    %vm242 = vcmp.gt.f32.partialorder %v235, 0.0
    %v243 = vmul.f32 %v192, 0.2
    %v244 = vmul.f32 %v194, 0.2
    %v245 = vmul.f32 %v233, 0.2
    %v246 = vmul.f32 %v235, 0.2
    %v247 = vsel %vm239, %v192, %v243
    %v248 = vsel %vm240, %v194, %v244
    %v249 = vsel %vm241, %v233, %v245
    %v250 = vsel %vm242, %v235, %v246
    %v251 = vpack.c.bf16 %v247, %v247
    %v252 = vpack.c.bf16 %v248, %v248
    %v253 = vpack.c.bf16 %v249, %v249
    %v254 = vpack.c.bf16 %v250, %v250
    %v255 = vld [vmem:[#allocation7] sm:$0xff]
    %v256 = vld [vmem:[#allocation7 + $0x8] sm:$0xff]
    %v257 = vld [vmem:[#allocation7 + $0x10] sm:$0xff]
    %v258 = vld [vmem:[#allocation7 + $0x18] sm:$0xff]
    %v259 = vld [vmem:[#allocation7 + $0x20] sm:$0xff]
    %v260 = vld [vmem:[#allocation7 + $0x28] sm:$0xff]
    %v261 = vld [vmem:[#allocation7 + $0x30] sm:$0xff]
    %v262 = vld [vmem:[#allocation7 + $0x38] sm:$0xff]
    %v263 = vld [vmem:[#allocation7 + $0x40] sm:$0xff]
    %v264 = vld [vmem:[#allocation7 + $0x48] sm:$0xff]
    %v265 = vld [vmem:[#allocation7 + $0x50] sm:$0xff]
    %v266 = vld [vmem:[#allocation7 + $0x58] sm:$0xff]
    %v267 = vld [vmem:[#allocation7 + $0x60] sm:$0xff]
    %v268 = vld [vmem:[#allocation7 + $0x68] sm:$0xff]
    %v269 = vld [vmem:[#allocation7 + $0x70] sm:$0xff]
    %v270 = vld [vmem:[#allocation7 + $0x78] sm:$0xff]
    %v271 = vld [vmem:[#allocation7 + $0x80] sm:$0xff]
    %v272 = vld [vmem:[#allocation7 + $0x88] sm:$0xff]
    %v273 = vld [vmem:[#allocation7 + $0x90] sm:$0xff]
    %v274 = vld [vmem:[#allocation7 + $0x98] sm:$0xff]
    %v275 = vld [vmem:[#allocation7 + $0xa0] sm:$0xff]
    %v276 = vld [vmem:[#allocation7 + $0xa8] sm:$0xff]
    %v277 = vld [vmem:[#allocation7 + $0xb0] sm:$0xff]
    %v278 = vld [vmem:[#allocation7 + $0xb8] sm:$0xff]
    %v279 = vld [vmem:[#allocation7 + $0xc0] sm:$0xff]
    %v280 = vld [vmem:[#allocation7 + $0xc8] sm:$0xff]
    %v281 = vld [vmem:[#allocation7 + $0xd0] sm:$0xff]
    %v282 = vld [vmem:[#allocation7 + $0xd8] sm:$0xff]
    %v283 = vld [vmem:[#allocation7 + $0xe0] sm:$0xff]
    %v284 = vld [vmem:[#allocation7 + $0xe8] sm:$0xff]
    %v285 = vld [vmem:[#allocation7 + $0xf0] sm:$0xff]
    %v286 = vld [vmem:[#allocation7 + $0xf8] sm:$0xff]
    %v287 = vld [vmem:[#allocation7 + $0x100] sm:$0xff]
    %v288 = vld [vmem:[#allocation7 + $0x108] sm:$0xff]
    %v289 = vld [vmem:[#allocation7 + $0x110] sm:$0xff]
    %v290 = vld [vmem:[#allocation7 + $0x118] sm:$0xff]
    %v291 = vld [vmem:[#allocation7 + $0x120] sm:$0xff]
    %v292 = vld [vmem:[#allocation7 + $0x128] sm:$0xff]
    %v293 = vld [vmem:[#allocation7 + $0x130] sm:$0xff]
    %v294 = vld [vmem:[#allocation7 + $0x138] sm:$0xff]
    %v295 = vld [vmem:[#allocation7 + $0x140] sm:$0xff]
    %v296 = vld [vmem:[#allocation7 + $0x148] sm:$0xff]
    %v297 = vld [vmem:[#allocation7 + $0x150] sm:$0xff]
    %v298 = vld [vmem:[#allocation7 + $0x158] sm:$0xff]
    %v299 = vld [vmem:[#allocation7 + $0x160] sm:$0xff]
    %v300 = vld [vmem:[#allocation7 + $0x168] sm:$0xff]
    %v301 = vld [vmem:[#allocation7 + $0x170] sm:$0xff]
    %v302 = vld [vmem:[#allocation7 + $0x178] sm:$0xff]
    %v303 = vld [vmem:[#allocation7 + $0x180] sm:$0xff]
    %v304 = vld [vmem:[#allocation7 + $0x188] sm:$0xff]
    %v305 = vld [vmem:[#allocation7 + $0x190] sm:$0xff]
    %v306 = vld [vmem:[#allocation7 + $0x198] sm:$0xff]
    %v307 = vld [vmem:[#allocation7 + $0x1a0] sm:$0xff]
    %v308 = vld [vmem:[#allocation7 + $0x1a8] sm:$0xff]
    %v309 = vld [vmem:[#allocation7 + $0x1b0] sm:$0xff]
    %v310 = vld [vmem:[#allocation7 + $0x1b8] sm:$0xff]
    %v311 = vld [vmem:[#allocation7 + $0x1c0] sm:$0xff]
    %v312 = vld [vmem:[#allocation7 + $0x1c8] sm:$0xff]
    %v313 = vld [vmem:[#allocation7 + $0x1d0] sm:$0xff]
    %v314 = vld [vmem:[#allocation7 + $0x1d8] sm:$0xff]
    %v315 = vld [vmem:[#allocation7 + $0x1e0] sm:$0xff]
    %v316 = vld [vmem:[#allocation7 + $0x1e8] sm:$0xff]
    %v317 = vld [vmem:[#allocation7 + $0x1f0] sm:$0xff]
    %v318 = vld [vmem:[#allocation7 + $0x1f8] sm:$0xff]
    %v319 = vld [vmem:[%s4] sm:$0x3]
    %v321 = vlaneseq
    %v322 = vshrl.u32 %v321, 7
    %v323 = vsub.s32 0, %v322
    %v324 = vrot.slane %v319, %v323
    %v325 = vlaneseq
    %v326 = vshrl.u32 %v325, 7
    %v327 = vsub.s32 1, %v326
    %v328 = vrot.slane %v319, %v327
    %v395 = vunpack.c.l.b16 %v255
    %v396 = vunpack.c.h.b16 %v255
    %v397 = vunpack.c.l.b16 %v256
    %v398 = vunpack.c.h.b16 %v256
    %v399 = vunpack.c.l.b16 %v257
    %v400 = vunpack.c.h.b16 %v257
    %v401 = vunpack.c.l.b16 %v258
    %v402 = vunpack.c.h.b16 %v258
    %v403 = vunpack.c.l.b16 %v259
    %v404 = vunpack.c.h.b16 %v259
    %v405 = vunpack.c.l.b16 %v260
    %v406 = vunpack.c.h.b16 %v260
    %v407 = vunpack.c.l.b16 %v261
    %v408 = vunpack.c.h.b16 %v261
    %v409 = vunpack.c.l.b16 %v262
    %v410 = vunpack.c.h.b16 %v262
    %v411 = vunpack.c.l.b16 %v263
    %v412 = vunpack.c.h.b16 %v263
    %v413 = vunpack.c.l.b16 %v264
    %v414 = vunpack.c.h.b16 %v264
    %v415 = vunpack.c.l.b16 %v265
    %v416 = vunpack.c.h.b16 %v265
    %v417 = vunpack.c.l.b16 %v266
    %v418 = vunpack.c.h.b16 %v266
    %v419 = vunpack.c.l.b16 %v267
    %v420 = vunpack.c.h.b16 %v267
    %v421 = vunpack.c.l.b16 %v268
    %v422 = vunpack.c.h.b16 %v268
    %v423 = vunpack.c.l.b16 %v269
    %v424 = vunpack.c.h.b16 %v269
    %v425 = vunpack.c.l.b16 %v270
    %v426 = vunpack.c.h.b16 %v270
    %v427 = vunpack.c.l.b16 %v271
    %v428 = vunpack.c.h.b16 %v271
    %v429 = vunpack.c.l.b16 %v272
    %v430 = vunpack.c.h.b16 %v272
    %v431 = vunpack.c.l.b16 %v273
    %v432 = vunpack.c.h.b16 %v273
    %v433 = vunpack.c.l.b16 %v274
    %v434 = vunpack.c.h.b16 %v274
    %v435 = vunpack.c.l.b16 %v275
    %v436 = vunpack.c.h.b16 %v275
    %v437 = vunpack.c.l.b16 %v276
    %v438 = vunpack.c.h.b16 %v276
    %v439 = vunpack.c.l.b16 %v277
    %v440 = vunpack.c.h.b16 %v277
    %v441 = vunpack.c.l.b16 %v278
    %v442 = vunpack.c.h.b16 %v278
    %v443 = vunpack.c.l.b16 %v279
    %v444 = vunpack.c.h.b16 %v279
    %v445 = vunpack.c.l.b16 %v280
    %v446 = vunpack.c.h.b16 %v280
    %v447 = vunpack.c.l.b16 %v281
    %v448 = vunpack.c.h.b16 %v281
    %v449 = vunpack.c.l.b16 %v282
    %v450 = vunpack.c.h.b16 %v282
    %v451 = vunpack.c.l.b16 %v283
    %v452 = vunpack.c.h.b16 %v283
    %v453 = vunpack.c.l.b16 %v284
    %v454 = vunpack.c.h.b16 %v284
    %v455 = vunpack.c.l.b16 %v285
    %v456 = vunpack.c.h.b16 %v285
    %v457 = vunpack.c.l.b16 %v286
    %v458 = vunpack.c.h.b16 %v286
    %v459 = vunpack.c.l.b16 %v287
    %v460 = vunpack.c.h.b16 %v287
    %v461 = vunpack.c.l.b16 %v288
    %v462 = vunpack.c.h.b16 %v288
    %v463 = vunpack.c.l.b16 %v289
    %v464 = vunpack.c.h.b16 %v289
    %v465 = vunpack.c.l.b16 %v290
    %v466 = vunpack.c.h.b16 %v290
    %v467 = vunpack.c.l.b16 %v291
    %v468 = vunpack.c.h.b16 %v291
    %v469 = vunpack.c.l.b16 %v292
    %v470 = vunpack.c.h.b16 %v292
    %v471 = vunpack.c.l.b16 %v293
    %v472 = vunpack.c.h.b16 %v293
    %v473 = vunpack.c.l.b16 %v294
    %v474 = vunpack.c.h.b16 %v294
    %v475 = vunpack.c.l.b16 %v295
    %v476 = vunpack.c.h.b16 %v295
    %v477 = vunpack.c.l.b16 %v296
    %v478 = vunpack.c.h.b16 %v296
    %v479 = vunpack.c.l.b16 %v297
    %v480 = vunpack.c.h.b16 %v297
    %v481 = vunpack.c.l.b16 %v298
    %v482 = vunpack.c.h.b16 %v298
    %v483 = vunpack.c.l.b16 %v299
    %v484 = vunpack.c.h.b16 %v299
    %v485 = vunpack.c.l.b16 %v300
    %v486 = vunpack.c.h.b16 %v300
    %v487 = vunpack.c.l.b16 %v301
    %v488 = vunpack.c.h.b16 %v301
    %v489 = vunpack.c.l.b16 %v302
    %v490 = vunpack.c.h.b16 %v302
    %v491 = vunpack.c.l.b16 %v303
    %v492 = vunpack.c.h.b16 %v303
    %v493 = vunpack.c.l.b16 %v304
    %v494 = vunpack.c.h.b16 %v304
    %v495 = vunpack.c.l.b16 %v305
    %v496 = vunpack.c.h.b16 %v305
    %v497 = vunpack.c.l.b16 %v306
    %v498 = vunpack.c.h.b16 %v306
    %v499 = vunpack.c.l.b16 %v307
    %v500 = vunpack.c.h.b16 %v307
    %v501 = vunpack.c.l.b16 %v308
    %v502 = vunpack.c.h.b16 %v308
    %v503 = vunpack.c.l.b16 %v309
    %v504 = vunpack.c.h.b16 %v309
    %v505 = vunpack.c.l.b16 %v310
    %v506 = vunpack.c.h.b16 %v310
    %v507 = vunpack.c.l.b16 %v311
    %v508 = vunpack.c.h.b16 %v311
    %v509 = vunpack.c.l.b16 %v312
    %v510 = vunpack.c.h.b16 %v312
    %v511 = vunpack.c.l.b16 %v313
    %v512 = vunpack.c.h.b16 %v313
    %v513 = vunpack.c.l.b16 %v314
    %v514 = vunpack.c.h.b16 %v314
    %v515 = vunpack.c.l.b16 %v315
    %v516 = vunpack.c.h.b16 %v315
    %v517 = vunpack.c.l.b16 %v316
    %v518 = vunpack.c.h.b16 %v316
    %v519 = vunpack.c.l.b16 %v317
    %v520 = vunpack.c.h.b16 %v317
    %v521 = vunpack.c.l.b16 %v318
    %v522 = vunpack.c.h.b16 %v318
    %v523 = vpack.c.b16 %v397, %v395
    %v524 = vpack.c.b16 %v398, %v396
    %v525 = vpack.c.b16 %v401, %v399
    %v526 = vpack.c.b16 %v402, %v400
    %v527 = vpack.c.b16 %v405, %v403
    %v528 = vpack.c.b16 %v406, %v404
    %v529 = vpack.c.b16 %v409, %v407
    %v530 = vpack.c.b16 %v410, %v408
    %v531 = vpack.c.b16 %v413, %v411
    %v532 = vpack.c.b16 %v414, %v412
    %v533 = vpack.c.b16 %v417, %v415
    %v534 = vpack.c.b16 %v418, %v416
    %v535 = vpack.c.b16 %v421, %v419
    %v536 = vpack.c.b16 %v422, %v420
    %v537 = vpack.c.b16 %v425, %v423
    %v538 = vpack.c.b16 %v426, %v424
    %v539 = vpack.c.b16 %v429, %v427
    %v540 = vpack.c.b16 %v430, %v428
    %v541 = vpack.c.b16 %v433, %v431
    %v542 = vpack.c.b16 %v434, %v432
    %v543 = vpack.c.b16 %v437, %v435
    %v544 = vpack.c.b16 %v438, %v436
    %v545 = vpack.c.b16 %v441, %v439
    %v546 = vpack.c.b16 %v442, %v440
    %v547 = vpack.c.b16 %v445, %v443
    %v548 = vpack.c.b16 %v446, %v444
    %v549 = vpack.c.b16 %v449, %v447
    %v550 = vpack.c.b16 %v450, %v448
    %v551 = vpack.c.b16 %v453, %v451
    %v552 = vpack.c.b16 %v454, %v452
    %v553 = vpack.c.b16 %v457, %v455
    %v554 = vpack.c.b16 %v458, %v456
    %v555 = vpack.c.b16 %v461, %v459
    %v556 = vpack.c.b16 %v462, %v460
    %v557 = vpack.c.b16 %v465, %v463
    %v558 = vpack.c.b16 %v466, %v464
    %v559 = vpack.c.b16 %v469, %v467
    %v560 = vpack.c.b16 %v470, %v468
    %v561 = vpack.c.b16 %v473, %v471
    %v562 = vpack.c.b16 %v474, %v472
    %v563 = vpack.c.b16 %v477, %v475
    %v564 = vpack.c.b16 %v478, %v476
    %v565 = vpack.c.b16 %v481, %v479
    %v566 = vpack.c.b16 %v482, %v480
    %v567 = vpack.c.b16 %v485, %v483
    %v568 = vpack.c.b16 %v486, %v484
    %v569 = vpack.c.b16 %v489, %v487
    %v570 = vpack.c.b16 %v490, %v488
    %v571 = vpack.c.b16 %v493, %v491
    %v572 = vpack.c.b16 %v494, %v492
    %v573 = vpack.c.b16 %v497, %v495
    %v574 = vpack.c.b16 %v498, %v496
    %v575 = vpack.c.b16 %v501, %v499
    %v576 = vpack.c.b16 %v502, %v500
    %v577 = vpack.c.b16 %v505, %v503
    %v578 = vpack.c.b16 %v506, %v504
    %v579 = vpack.c.b16 %v509, %v507
    %v580 = vpack.c.b16 %v510, %v508
    %v581 = vpack.c.b16 %v513, %v511
    %v582 = vpack.c.b16 %v514, %v512
    %v583 = vpack.c.b16 %v517, %v515
    %v584 = vpack.c.b16 %v518, %v516
    %v585 = vpack.c.b16 %v521, %v519
    %v586 = vpack.c.b16 %v522, %v520
    %651 = vmatprep.subr.bf16.mxu0 %v524
    %652 = vmatpush1.bf16.msra.mxu0 %v523
    %653 = vmatprep.subr.bf16.mxu0 %v526
    %654 = vmatpush1.bf16.msra.mxu0 %v525
    %655 = vmatprep.subr.bf16.mxu0 %v528
    %656 = vmatpush1.bf16.msra.mxu0 %v527
    %657 = vmatprep.subr.bf16.mxu0 %v530
    %658 = vmatpush1.bf16.msra.mxu0 %v529
    %659 = vmatprep.subr.bf16.mxu0 %v532
    %660 = vmatpush1.bf16.msra.mxu0 %v531
    %661 = vmatprep.subr.bf16.mxu0 %v534
    %662 = vmatpush1.bf16.msra.mxu0 %v533
    %663 = vmatprep.subr.bf16.mxu0 %v536
    %664 = vmatpush1.bf16.msra.mxu0 %v535
    %665 = vmatprep.subr.bf16.mxu0 %v538
    %666 = vmatpush1.bf16.msra.mxu0 %v537
    %667 = vmatprep.subr.bf16.mxu0 %v540
    %668 = vmatpush1.bf16.msra.mxu0 %v539
    %669 = vmatprep.subr.bf16.mxu0 %v542
    %670 = vmatpush1.bf16.msra.mxu0 %v541
    %671 = vmatprep.subr.bf16.mxu0 %v544
    %672 = vmatpush1.bf16.msra.mxu0 %v543
    %673 = vmatprep.subr.bf16.mxu0 %v546
    %674 = vmatpush1.bf16.msra.mxu0 %v545
    %675 = vmatprep.subr.bf16.mxu0 %v548
    %676 = vmatpush1.bf16.msra.mxu0 %v547
    %677 = vmatprep.subr.bf16.mxu0 %v550
    %678 = vmatpush1.bf16.msra.mxu0 %v549
    %679 = vmatprep.subr.bf16.mxu0 %v552
    %680 = vmatpush1.bf16.msra.mxu0 %v551
    %681 = vmatprep.subr.bf16.mxu0 %v554
    %682 = vmatpush1.bf16.msra.mxu0 %v553
    %683 = vmatprep.mubr.bf16.mxu0 %v252
    %684 = vmatmul.mubr.bf16.gmra.mrb[0].mxu0 %v251
    %v685 = vpop.f32.mrb[0].mxu0
    %v686 = vadd.f32 %v324, %v685
    %v687 = vpop.f32.mrb[0].mxu0
    %v688 = vadd.f32 %v328, %v687
    %v689 = vpop.f32.mrb[0].mxu0
    %v690 = vpop.f32.mrb[0].mxu0
    %691 = vdwg.mxu0
    %692 = vmatprep.subr.bf16.mxu0 %v556
    %693 = vmatpush1.bf16.msra.mxu0 %v555
    %694 = vmatprep.subr.bf16.mxu0 %v558
    %695 = vmatpush1.bf16.msra.mxu0 %v557
    %696 = vmatprep.subr.bf16.mxu0 %v560
    %697 = vmatpush1.bf16.msra.mxu0 %v559
    %698 = vmatprep.subr.bf16.mxu0 %v562
    %699 = vmatpush1.bf16.msra.mxu0 %v561
    %700 = vmatprep.subr.bf16.mxu0 %v564
    %701 = vmatpush1.bf16.msra.mxu0 %v563
    %702 = vmatprep.subr.bf16.mxu0 %v566
    %703 = vmatpush1.bf16.msra.mxu0 %v565
    %704 = vmatprep.subr.bf16.mxu0 %v568
    %705 = vmatpush1.bf16.msra.mxu0 %v567
    %706 = vmatprep.subr.bf16.mxu0 %v570
    %707 = vmatpush1.bf16.msra.mxu0 %v569
    %708 = vmatprep.subr.bf16.mxu0 %v572
    %709 = vmatpush1.bf16.msra.mxu0 %v571
    %710 = vmatprep.subr.bf16.mxu0 %v574
    %711 = vmatpush1.bf16.msra.mxu0 %v573
    %712 = vmatprep.subr.bf16.mxu0 %v576
    %713 = vmatpush1.bf16.msra.mxu0 %v575
    %714 = vmatprep.subr.bf16.mxu0 %v578
    %715 = vmatpush1.bf16.msra.mxu0 %v577
    %716 = vmatprep.subr.bf16.mxu0 %v580
    %717 = vmatpush1.bf16.msra.mxu0 %v579
    %718 = vmatprep.subr.bf16.mxu0 %v582
    %719 = vmatpush1.bf16.msra.mxu0 %v581
    %720 = vmatprep.subr.bf16.mxu0 %v584
    %721 = vmatpush1.bf16.msra.mxu0 %v583
    %722 = vmatprep.subr.bf16.mxu0 %v586
    %723 = vmatpush1.bf16.msra.mxu0 %v585
    %724 = vmatprep.mubr.bf16.mxu0 %v254
    %725 = vmatmul.mubr.bf16.gmra.mrb[0].mxu0 %v253
    %v726 = vpop.f32.mrb[0].mxu0
    %v727 = vadd.f32 %v686, %v726
    %v728 = vpop.f32.mrb[0].mxu0
    %v729 = vadd.f32 %v688, %v728
    %v730 = vpop.f32.mrb[0].mxu0
    %v731 = vpop.f32.mrb[0].mxu0
    %732 = vdwg.mxu0
    %vm733 = vcmp.gt.f32.partialorder %v727, 0.0
    %vm734 = vcmp.gt.f32.partialorder %v729, 0.0
    %v735 = vmul.f32 %v727, 0.2
    %v736 = vmul.f32 %v729, 0.2
    %v737 = vsel %vm733, %v727, %v735
    %v738 = vsel %vm734, %v729, %v736
    %v739 = vpack.c.bf16 %v737, %v737
    %v740 = vpack.c.bf16 %v738, %v738
    %v741 = vld [vmem:[#allocation8] sm:$0xf]
    %v742 = vld [vmem:[#allocation8 + $0x4] sm:$0xf]
    %v743 = vld [vmem:[#allocation8 + $0x8] sm:$0xf]
    %v744 = vld [vmem:[#allocation8 + $0xc] sm:$0xf]
    %v745 = vld [vmem:[#allocation8 + $0x10] sm:$0xf]
    %v746 = vld [vmem:[#allocation8 + $0x14] sm:$0xf]
    %v747 = vld [vmem:[#allocation8 + $0x18] sm:$0xf]
    %v748 = vld [vmem:[#allocation8 + $0x1c] sm:$0xf]
    %v749 = vld [vmem:[#allocation8 + $0x20] sm:$0xf]
    %v750 = vld [vmem:[#allocation8 + $0x24] sm:$0xf]
    %v751 = vld [vmem:[#allocation8 + $0x28] sm:$0xf]
    %v752 = vld [vmem:[#allocation8 + $0x2c] sm:$0xf]
    %v753 = vld [vmem:[#allocation8 + $0x30] sm:$0xf]
    %v754 = vld [vmem:[#allocation8 + $0x34] sm:$0xf]
    %v755 = vld [vmem:[#allocation8 + $0x38] sm:$0xf]
    %v756 = vld [vmem:[#allocation8 + $0x3c] sm:$0xf]
    %v757 = vld [vmem:[#allocation8 + $0x40] sm:$0xf]
    %v758 = vld [vmem:[#allocation8 + $0x44] sm:$0xf]
    %v759 = vld [vmem:[#allocation8 + $0x48] sm:$0xf]
    %v760 = vld [vmem:[#allocation8 + $0x4c] sm:$0xf]
    %v761 = vld [vmem:[#allocation8 + $0x50] sm:$0xf]
    %v762 = vld [vmem:[#allocation8 + $0x54] sm:$0xf]
    %v763 = vld [vmem:[#allocation8 + $0x58] sm:$0xf]
    %v764 = vld [vmem:[#allocation8 + $0x5c] sm:$0xf]
    %v765 = vld [vmem:[#allocation8 + $0x60] sm:$0xf]
    %v766 = vld [vmem:[#allocation8 + $0x64] sm:$0xf]
    %v767 = vld [vmem:[#allocation8 + $0x68] sm:$0xf]
    %v768 = vld [vmem:[#allocation8 + $0x6c] sm:$0xf]
    %v769 = vld [vmem:[#allocation8 + $0x70] sm:$0xf]
    %v770 = vld [vmem:[#allocation8 + $0x74] sm:$0xf]
    %v771 = vld [vmem:[#allocation8 + $0x78] sm:$0xf]
    %v772 = vld [vmem:[#allocation8 + $0x7c] sm:$0xf]
    %v773 = vld [vmem:[%s6] sm:$0x1]
    %v775 = vlaneseq
    %v776 = vshrl.u32 %v775, 7
    %v777 = vsub.s32 0, %v776
    %v778 = vrot.slane %v773, %v777
    %v812 = vunpack.c.l.b16 %v741
    %v813 = vunpack.c.l.b16 %v742
    %v814 = vunpack.c.l.b16 %v743
    %v815 = vunpack.c.l.b16 %v744
    %v816 = vunpack.c.l.b16 %v745
    %v817 = vunpack.c.l.b16 %v746
    %v818 = vunpack.c.l.b16 %v747
    %v819 = vunpack.c.l.b16 %v748
    %v820 = vunpack.c.l.b16 %v749
    %v821 = vunpack.c.l.b16 %v750
    %v822 = vunpack.c.l.b16 %v751
    %v823 = vunpack.c.l.b16 %v752
    %v824 = vunpack.c.l.b16 %v753
    %v825 = vunpack.c.l.b16 %v754
    %v826 = vunpack.c.l.b16 %v755
    %v827 = vunpack.c.l.b16 %v756
    %v828 = vunpack.c.l.b16 %v757
    %v829 = vunpack.c.l.b16 %v758
    %v830 = vunpack.c.l.b16 %v759
    %v831 = vunpack.c.l.b16 %v760
    %v832 = vunpack.c.l.b16 %v761
    %v833 = vunpack.c.l.b16 %v762
    %v834 = vunpack.c.l.b16 %v763
    %v835 = vunpack.c.l.b16 %v764
    %v836 = vunpack.c.l.b16 %v765
    %v837 = vunpack.c.l.b16 %v766
    %v838 = vunpack.c.l.b16 %v767
    %v839 = vunpack.c.l.b16 %v768
    %v840 = vunpack.c.l.b16 %v769
    %v841 = vunpack.c.l.b16 %v770
    %v842 = vunpack.c.l.b16 %v771
    %v843 = vunpack.c.l.b16 %v772
    %v844 = vpack.c.b16 %v813, %v812
    %v845 = vpack.c.b16 %v815, %v814
    %v846 = vpack.c.b16 %v817, %v816
    %v847 = vpack.c.b16 %v819, %v818
    %v848 = vpack.c.b16 %v821, %v820
    %v849 = vpack.c.b16 %v823, %v822
    %v850 = vpack.c.b16 %v825, %v824
    %v851 = vpack.c.b16 %v827, %v826
    %v852 = vpack.c.b16 %v829, %v828
    %v853 = vpack.c.b16 %v831, %v830
    %v854 = vpack.c.b16 %v833, %v832
    %v855 = vpack.c.b16 %v835, %v834
    %v856 = vpack.c.b16 %v837, %v836
    %v857 = vpack.c.b16 %v839, %v838
    %v858 = vpack.c.b16 %v841, %v840
    %v859 = vpack.c.b16 %v843, %v842
    %876 = vmatprep.subr.bf16.mxu0 0
    %877 = vmatpush1.bf16.msra.mxu0 %v844
    %878 = vmatprep.subr.bf16.mxu0 0
    %879 = vmatpush1.bf16.msra.mxu0 %v845
    %880 = vmatprep.subr.bf16.mxu0 0
    %881 = vmatpush1.bf16.msra.mxu0 %v846
    %882 = vmatprep.subr.bf16.mxu0 0
    %883 = vmatpush1.bf16.msra.mxu0 %v847
    %884 = vmatprep.subr.bf16.mxu0 0
    %885 = vmatpush1.bf16.msra.mxu0 %v848
    %886 = vmatprep.subr.bf16.mxu0 0
    %887 = vmatpush1.bf16.msra.mxu0 %v849
    %888 = vmatprep.subr.bf16.mxu0 0
    %889 = vmatpush1.bf16.msra.mxu0 %v850
    %890 = vmatprep.subr.bf16.mxu0 0
    %891 = vmatpush1.bf16.msra.mxu0 %v851
    %892 = vmatprep.subr.bf16.mxu0 0
    %893 = vmatpush1.bf16.msra.mxu0 %v852
    %894 = vmatprep.subr.bf16.mxu0 0
    %895 = vmatpush1.bf16.msra.mxu0 %v853
    %896 = vmatprep.subr.bf16.mxu0 0
    %897 = vmatpush1.bf16.msra.mxu0 %v854
    %898 = vmatprep.subr.bf16.mxu0 0
    %899 = vmatpush1.bf16.msra.mxu0 %v855
    %900 = vmatprep.subr.bf16.mxu0 0
    %901 = vmatpush1.bf16.msra.mxu0 %v856
    %902 = vmatprep.subr.bf16.mxu0 0
    %903 = vmatpush1.bf16.msra.mxu0 %v857
    %904 = vmatprep.subr.bf16.mxu0 0
    %905 = vmatpush1.bf16.msra.mxu0 %v858
    %906 = vmatprep.subr.bf16.mxu0 0
    %907 = vmatpush1.bf16.msra.mxu0 %v859
    %908 = vmatprep.mubr.bf16.mxu0 %v740
    %909 = vmatmul.mubr.bf16.gmra.mrb[0].mxu0 %v739
    %v910 = vpop.f32.mrb[0].mxu0
    %v911 = vadd.f32 %v778, %v910
    %v912 = vpop.f32.mrb[0].mxu0
    %v913 = vpop.f32.mrb[0].mxu0
    %v914 = vpop.f32.mrb[0].mxu0
    %915 = vdwg.mxu0
    %v916 = vxor.u32 %v911, 2147483648
    %v917 = vmul.f32 %v916, 1.442695
    %v918 = vpow.pop %v917
    %v919 = vadd.f32 %v918, 1.0
    %v920 = vrcp.pop %v919
    %v921 = vmul.f32 1.0, %v920
    %922 = vst [vmem:[#allocation10] sm:$0xff] %v921
    // Predicated region
    $region46: #{tpu_custom_call.1} parent=1 // pred_check
      _
    $region47: #{tpu_custom_call.1} parent=1 // pred_check_branch
      %924 = sbr.rel (0) target = $region49
    $region48: #{tpu_custom_call.1} parent=1 // pred_region
      %s926 = ssub.s32 128, 128
      %927 = vsyncadd [#allocation4], %s926
      %s929 = sshll.u32 [#allocation10], 4
      %s930 = int_to_ptr.vmem [resolvable:$true] %s929
      %932 = dma.vmem_to_hbm [thread:$0]  %s930, 128, %s7, [#allocation4]
    $region49: #{tpu_custom_call.1} parent=1 // pred_fallthru
      _
    // Predicated region
    $region50: #{tpu_custom_call.1} parent=1 // pred_check
      _
    $region51: #{tpu_custom_call.1} parent=1 // pred_check_branch
      %934 = sbr.rel (0) target = $region53
    $region52: #{tpu_custom_call.1} parent=1 // pred_region
      %935 = dma.done [#allocation4], 128
    $region53: #{tpu_custom_call.1} parent=1 // pred_fallthru
      _
    %936 = vsyncpa [#allocation3], 1
    %937 = vsyncpa [#allocation6], 1
    %938 = vsyncpa [#allocation9], 1
    %939 = vsyncpa [#allocation4], 1

</llo_original>
